<compile_context>
chip_gen: v7x
topology: tpu7x:2x2x1
jax: 0.10.0
libtpu: 0.0.40
codegen_flags: <defaults>
</compile_context>

<pallas_src>
import functools

import jax
import jax.numpy as jnp
from jax.experimental import pallas as pl
from jax.experimental.pallas import tpu as pltpu


def _round_up(x, m):
    return (x + m - 1) // m * m


def _device_info():
    """(device_kind, per-core VMEM capacity in bytes), with safe fallbacks."""
    kind = ""
    try:
        kind = jax.devices()[0].device_kind.lower()
    except Exception:
        pass
    try:
        vmem_cap = int(pltpu.get_tpu_info().vmem_capacity_bytes)
    except Exception:
        vmem_cap = 64 << 20          # conservative: v7x per-core VMEM
    return kind, vmem_cap


# ---------------------------------------------------------------------------
# Fused path: whole problem resident in VMEM, single grid-less kernel.
# ---------------------------------------------------------------------------
def _fused_kernel(z_ref, w1_ref, b1_ref, w2_ref, rep_ref, eye_ref, o_ref, *,
                  n_nodes, tanh_dtype):
    """SemanticAttention forward, everything in VMEM.

    z_ref  : (N, M*D)    2D view of z_m
    w1_ref : (M*D, M*H)  block-diagonal Linear1 weight
    b1_ref : (1, M*H)    tiled Linear1 bias
    w2_ref : (M*H, M)    block-diagonal Linear2 weight (one column / metapath)
    rep_ref: (M, M*D)    rep[m, m*D+j] = 1   (broadcasts a[m] over D lanes)
    eye_ref: (M*D, D)    M stacked DxD identities (metapath-sum scatter)
    """
    x = z_ref[...]                                                    # (N, M*D)
    pre = jnp.dot(x, w1_ref[...], preferred_element_type=jnp.float32)
    pre = pre + b1_ref[...]
    h = jnp.tanh(pre.astype(tanh_dtype)).astype(jnp.float32)          # (N, M*H)
    h_sum = jnp.sum(h, axis=0, keepdims=True)                         # (1, M*H)
    logits = jnp.dot(h_sum, w2_ref[...],
                     preferred_element_type=jnp.float32) * (1.0 / n_nodes)  # (1, M)
    logits = logits - jnp.max(logits, axis=1, keepdims=True)
    e = jnp.exp(logits)
    a = e / jnp.sum(e, axis=1, keepdims=True)                         # softmax over M
    a_rep = jnp.dot(a, rep_ref[...], preferred_element_type=jnp.float32)    # (1, M*D)
    xs = x.astype(jnp.float32) * a_rep                                # per-metapath scale
    o_ref[...] = jnp.dot(xs, eye_ref[...],
                         preferred_element_type=jnp.float32).astype(o_ref.dtype)


# ---------------------------------------------------------------------------
# Stage 1: acc[c] += sum_n tanh(z2d @ W1_bd + b1) over this chunk's node tiles.
# Grid = (chunks, node-tiles-per-chunk); chunk axis is "parallel" (megacore).
# ---------------------------------------------------------------------------
def _hsum_kernel(z_ref, w1_ref, b1_ref, acc_ref, *, n_total, tn,
                 tiles_per_chunk, tanh_dtype):
    c = pl.program_id(0)          # parallel chunk
    i = pl.program_id(1)          # sequential node tile within the chunk

    @pl.when(i == 0)
    def _():
        acc_ref[...] = jnp.zeros_like(acc_ref)

    x = z_ref[...]                                                    # (tn, M*D)
    pre = jnp.dot(x, w1_ref[...], preferred_element_type=jnp.float32)
    h = jnp.tanh((pre + b1_ref[...]).astype(tanh_dtype)).astype(jnp.float32)

    base = (c * tiles_per_chunk + i) * tn
    valid = n_total - base        # in-range node rows in this tile

    @pl.when(valid >= tn)         # full tile: no masking work at all
    def _():
        acc_ref[...] += jnp.sum(h, axis=0, keepdims=True)[None]

    @pl.when(valid < tn)          # ragged tail tile or phantom tile (valid <= 0)
    def _():
        row = jax.lax.broadcasted_iota(jnp.int32, h.shape, 0)
        hm = jnp.where(row < valid, h, 0.0)                           # also kills NaN garbage
        acc_ref[...] += jnp.sum(hm, axis=0, keepdims=True)[None]


# ---------------------------------------------------------------------------
# Stage 2: o = z2d_tile @ S,   S = blockdiag_m(a[m] * I_D)  (weighted sum).
# ---------------------------------------------------------------------------
def _wsum_kernel(z_ref, s_ref, o_ref):
    o_ref[...] = jnp.dot(z_ref[...], s_ref[...],
                         preferred_element_type=jnp.float32).astype(o_ref.dtype)


def semantic_attention(z_m, w1, b1, w2, *, tn=None, force_two_stage=False,
                       tanh_dtype=None):
    """HAN SemanticAttention forward.  z_m: (N, M, D) -> (N, D).

    w1: (D, H) Linear1 weight (applied as x @ w1), b1: (H,) or (1, H),
    w2: (H, 1) Linear2 weight (no bias).
    """
    N, M, D = z_m.shape
    assert w1.shape[0] == D
    H = w1.shape[1]
    out_dtype = z_m.dtype

    kind, vmem_cap = _device_info()
    is_v7 = "v7" in kind
    if tanh_dtype is None:
        # bf16 EUP on v6e/v7x -> ~2x tanh throughput; v5e has no bf16 EUP.
        tanh_dtype = jnp.bfloat16 if ("v6" in kind or is_v7) else jnp.float32
    tanh_bytes = jnp.dtype(tanh_dtype).itemsize
    in_bytes = jnp.dtype(z_m.dtype).itemsize

    # Lane-dense 2D views / tiny constants (built once in XLA).
    z2d = z_m.reshape(N, M * D)                                   # free contiguous view
    w2_mat = jnp.asarray(w2).reshape(H, 1)
    b1_t = jnp.tile(jnp.asarray(b1).reshape(1, H), (1, M))        # (1, M*H)
    w1_bd = jnp.kron(jnp.eye(M, dtype=w1.dtype), w1)              # (M*D, M*H)
    eye_t = jnp.tile(jnp.eye(D, dtype=jnp.float32), (M, 1))       # (M*D, D)

    md_pad = _round_up(M * D, 128)
    mh_pad = _round_up(M * H, 128)
    d_pad = _round_up(D, 128)

    # ------------------ fused single-kernel path (z read from HBM once) -----
    weights_bytes = 4 * (_round_up(M * D, 8) * (mh_pad + d_pad)   # w1_bd + eye_t
                         + _round_up(M * H, 8) * 128              # w2_bd
                         + 8 * mh_pad                             # b1_t
                         + _round_up(M, 8) * md_pad)              # rep_t
    fused_est = (_round_up(N, 8) * (md_pad * in_bytes             # z2d
                                    + mh_pad * (4 + tanh_bytes)   # pre/h + tanh copy
                                    + md_pad * 4                  # scaled copy xs
                                    + d_pad * 4)                  # out
                 + weights_bytes)
    fused_budget = (vmem_cap * 2) // 5        # ~25 MiB on v7x, ~51 MiB on v5e/v6e
    if not force_two_stage and fused_est <= fused_budget:
        w2_bd = jnp.kron(jnp.eye(M, dtype=jnp.float32),
                         w2_mat.astype(jnp.float32))              # (M*H, M)
        rep_t = jnp.repeat(jnp.eye(M, dtype=jnp.float32), D, axis=1)   # (M, M*D)
        fused_limit = int(min(vmem_cap * 3 // 4, max(32 << 20, 2 * fused_est)))
        return pl.pallas_call(
            functools.partial(_fused_kernel, n_nodes=N, tanh_dtype=tanh_dtype),
            out_shape=jax.ShapeDtypeStruct((N, D), out_dtype),
            compiler_params=pltpu.CompilerParams(vmem_limit_bytes=fused_limit),
        )(z2d, w1_bd, b1_t, w2_bd, rep_t, eye_t)

    # ------------------ two-stage tiled path ---------------------------------
    # Node tile: fill a generation-aware working-set budget (the z tile is
    # double-buffered; pre/tanh intermediates are (tn, M*H) f32/bf16).
    per_row = 2 * md_pad * in_bytes + mh_pad * (4 + tanh_bytes)
    work_budget = (8 << 20) if is_v7 else (16 << 20)
    if tn is None:
        tn = max(8, (work_budget // per_row) // 8 * 8)
    tn = int(tn)
    if tn >= N:
        tn = N
    else:
        tn = max(8, tn // 8 * 8)

    num_tiles = pl.cdiv(N, tn)
    # Always split the node reduction into 2 chunks so the leading "parallel"
    # axis can shard across v7x's two TensorCores; odd tile counts produce a
    # phantom tile whose contribution is masked to zero in the kernel.
    n_chunks = 2 if num_tiles >= 2 else 1
    tiles_per_chunk = pl.cdiv(num_tiles, n_chunks)

    stage_limit = int(min(vmem_cap * 3 // 4, (48 << 20) if is_v7 else (64 << 20)))
    cp1 = pltpu.CompilerParams(dimension_semantics=("parallel", "arbitrary"),
                               vmem_limit_bytes=stage_limit)
    cp2 = pltpu.CompilerParams(dimension_semantics=("parallel",),
                               vmem_limit_bytes=stage_limit)

    # Stage 1: per-chunk partial sums of tanh(z2d @ W1_bd + b1) -> (chunks,1,M*H).
    # The z index map is clamped so phantom tiles re-read the last real tile
    # (their contribution is zeroed by the in-kernel mask).
    z_map = lambda c, i: (jnp.minimum(c * tiles_per_chunk + i, num_tiles - 1), 0)
    partials = pl.pallas_call(
        functools.partial(_hsum_kernel, n_total=N, tn=tn,
                          tiles_per_chunk=tiles_per_chunk, tanh_dtype=tanh_dtype),
        out_shape=jax.ShapeDtypeStruct((n_chunks, 1, M * H), jnp.float32),
        grid=(n_chunks, tiles_per_chunk),
        in_specs=[
            pl.BlockSpec((tn, M * D), z_map),
            pl.BlockSpec((M * D, M * H), lambda c, i: (0, 0)),
            pl.BlockSpec((1, M * H), lambda c, i: (0, 0)),
        ],
        out_specs=pl.BlockSpec((1, 1, M * H), lambda c, i: (c, 0, 0)),
        compiler_params=cp1,
    )(z2d, w1_bd, b1_t)

    # Tiny finalize in plain JAX: the w2 contraction and the mean over nodes
    # are linear, so applying them to the summed hidden activations is exact.
    h_sum = partials.reshape(n_chunks, M * H).sum(axis=0).reshape(M, H)
    logits = jnp.dot(h_sum, w2_mat.astype(jnp.float32)) / jnp.float32(N)   # (M, 1)
    a = jax.nn.softmax(logits, axis=0)                                      # (M, 1)

    # Stage 2: weighted metapath sum as a lane-dense MXU matmul z2d @ S.
    a_rep = jnp.repeat(a[:, 0], D)[:, None]                # (M*D, 1)
    s_mat = eye_t * a_rep                                  # blockdiag(a[m] * I_D)
    # Note: the last (ragged) node tile reads OOB rows of z2d (clamped by
    # Pallas) and writes garbage only into output rows that Pallas drops.
    z_out = pl.pallas_call(
        _wsum_kernel,
        out_shape=jax.ShapeDtypeStruct((N, D), out_dtype),
        grid=(num_tiles,),
        in_specs=[
            pl.BlockSpec((tn, M * D), lambda i: (i, 0)),
            pl.BlockSpec((M * D, D), lambda i: (0, 0)),
        ],
        out_specs=pl.BlockSpec((tn, D), lambda i: (i, 0)),
        compiler_params=cp2,
    )(z2d, s_mat)
    return z_out


def semantic_attention_ref(z_m, w1, b1, w2):
    """Pure-JAX reference mirroring the PyTorch forward exactly."""
    s = jnp.tanh(z_m @ w1 + jnp.asarray(b1).reshape(1, -1)) @ jnp.asarray(w2).reshape(-1, 1)
    w = s.mean(axis=0)                            # (M, 1)
    a = jax.nn.softmax(w, axis=0)                 # softmax over metapaths
    return (z_m * a[None, :, :]).sum(axis=1)      # (N, D)


if __name__ == "__main__":
    key = jax.random.PRNGKey(0)
    k_z, k_w1, k_b1, k_w2, k_z2 = jax.random.split(key, 5)

    # Small shapes consistent with the module (hidden_dim default = 128).
    N, M, D, H = 16, 4, 32, 128
    z_m = jax.random.normal(k_z, (N, M, D), dtype=jnp.float32)
    w1 = jax.random.normal(k_w1, (D, H), dtype=jnp.float32) * 0.1
    b1 = jax.random.normal(k_b1, (1, H), dtype=jnp.float32) * 0.1
    w2 = jax.random.normal(k_w2, (H, 1), dtype=jnp.float32) * 0.1

    ref_small = semantic_attention_ref(z_m, w1, b1, w2)

    # 1) Fused single-kernel path, exact f32 tanh.
    z1 = jax.block_until_ready(
        semantic_attention(z_m, w1, b1, w2, tanh_dtype=jnp.float32))
    assert z1.shape == (N, D)
    assert jnp.allclose(z1, ref_small, rtol=1e-4, atol=1e-4), \
        float(jnp.max(jnp.abs(z1 - ref_small)))

    # 2) Two-stage tiled path: ragged tail tile + 2-chunk parallel reduction.
    N2 = 1000
    z_m2 = jax.random.normal(k_z2, (N2, M, D), dtype=jnp.float32)
    ref_big = semantic_attention_ref(z_m2, w1, b1, w2)

    z2 = jax.block_until_ready(
        semantic_attention(z_m2, w1, b1, w2, force_two_stage=True, tn=128,
                           tanh_dtype=jnp.float32))
    assert z2.shape == (N2, D)
    assert jnp.allclose(z2, ref_big, rtol=1e-4, atol=1e-4), \
        float(jnp.max(jnp.abs(z2 - ref_big)))

    # 3) Odd tile count: exercises the phantom-tile mask of the always-on
    #    2-chunk split (7 tiles -> chunk 1 has one phantom step).
    z3 = jax.block_until_ready(
        semantic_attention(z_m2, w1, b1, w2, force_two_stage=True, tn=144,
                           tanh_dtype=jnp.float32))
    assert jnp.allclose(z3, ref_big, rtol=1e-4, atol=1e-4), \
        float(jnp.max(jnp.abs(z3 - ref_big)))

    # 4) Default auto config: generation-aware fused path; bf16 tanh on
    #    v6e/v7x (looser tolerance), exact f32 on v5e.
    z4 = jax.block_until_ready(semantic_attention(z_m2, w1, b1, w2))
    assert z4.shape == (N2, D)
    assert jnp.allclose(z4, ref_big, rtol=1e-2, atol=1e-2), \
        float(jnp.max(jnp.abs(z4 - ref_big)))

    print("KERNEL_OK")
</pallas_src>

<mosaic_0001>
module attributes {stable_mosaic.version = 11 : i64} {
  func.func @_fused_kernel(%arg0: memref<16x128xf32, #tpu.memory_space<vmem>>, %arg1: memref<128x512xf32, #tpu.memory_space<vmem>>, %arg2: memref<1x512xf32, #tpu.memory_space<vmem>>, %arg3: memref<512x4xf32, #tpu.memory_space<vmem>>, %arg4: memref<4x128xf32, #tpu.memory_space<vmem>>, %arg5: memref<128x32xf32, #tpu.memory_space<vmem>>, %arg6: memref<16x32xf32, #tpu.memory_space<vmem>>) attributes {dimension_semantics = [], scalar_prefetch = 0 : i64, scratch_operands = 0 : i64, tpu.core_type = #tpu.core_type<tc>} {
    %c0 = arith.constant 0 : index
    %c0_0 = arith.constant 0 : index
    %0 = vector.load %arg0[%c0, %c0_0] : memref<16x128xf32, #tpu.memory_space<vmem>>, vector<16x128xf32>
    %c0_1 = arith.constant 0 : index
    %c0_2 = arith.constant 0 : index
    %1 = vector.load %arg1[%c0_1, %c0_2] : memref<128x512xf32, #tpu.memory_space<vmem>>, vector<128x512xf32>
    %cst = arith.constant dense<0.000000e+00> : vector<16x512xf32>
    %2 = tpu.matmul %0, %1, %cst {dimension_numbers = #tpu.dot_dimension_numbers<[1], [0], [0], [1], [0, 0, 1, 1], [], []>} : vector<16x128xf32>, vector<128x512xf32>, vector<16x512xf32> -> vector<16x512xf32>
    %c0_3 = arith.constant 0 : index
    %c0_4 = arith.constant 0 : index
    %3 = vector.load %arg2[%c0_3, %c0_4] : memref<1x512xf32, #tpu.memory_space<vmem>>, vector<1x512xf32>
    %4 = vector.broadcast %3 : vector<1x512xf32> to vector<16x512xf32>
    %5 = arith.addf %2, %4 : vector<16x512xf32>
    %6 = math.tanh %5 : vector<16x512xf32>
    %cst_5 = arith.constant dense<0.000000e+00> : vector<512xf32>
    %7 = vector.multi_reduction <add>, %6, %cst_5 [0] : vector<16x512xf32> to vector<512xf32>
    %8 = vector.shape_cast %7 : vector<512xf32> to vector<1x512xf32>
    %c0_6 = arith.constant 0 : index
    %c0_7 = arith.constant 0 : index
    %9 = vector.load %arg3[%c0_6, %c0_7] : memref<512x4xf32, #tpu.memory_space<vmem>>, vector<512x4xf32>
    %cst_8 = arith.constant dense<0.000000e+00> : vector<1x4xf32>
    %10 = tpu.matmul %8, %9, %cst_8 {dimension_numbers = #tpu.dot_dimension_numbers<[1], [0], [0], [1], [0, 0, 1, 1], [], []>} : vector<1x512xf32>, vector<512x4xf32>, vector<1x4xf32> -> vector<1x4xf32>
    %cst_9 = arith.constant 6.250000e-02 : f32
    %11 = vector.broadcast %cst_9 : f32 to vector<1x4xf32>
    %12 = arith.mulf %10, %11 : vector<1x4xf32>
    %cst_10 = arith.constant dense<0xFF800000> : vector<1xf32>
    %13 = vector.multi_reduction <maximumf>, %12, %cst_10 [1] : vector<1x4xf32> to vector<1xf32>
    %14 = vector.shape_cast %13 : vector<1xf32> to vector<1x1xf32>
    %15 = vector.broadcast %14 : vector<1x1xf32> to vector<1x4xf32>
    %16 = arith.subf %12, %15 : vector<1x4xf32>
    %17 = math.exp %16 : vector<1x4xf32>
    %cst_11 = arith.constant dense<0.000000e+00> : vector<1xf32>
    %18 = vector.multi_reduction <add>, %17, %cst_11 [1] : vector<1x4xf32> to vector<1xf32>
    %19 = vector.shape_cast %18 : vector<1xf32> to vector<1x1xf32>
    %20 = vector.broadcast %19 : vector<1x1xf32> to vector<1x4xf32>
    %21 = arith.divf %17, %20 : vector<1x4xf32>
    %c0_12 = arith.constant 0 : index
    %c0_13 = arith.constant 0 : index
    %22 = vector.load %arg4[%c0_12, %c0_13] : memref<4x128xf32, #tpu.memory_space<vmem>>, vector<4x128xf32>
    %cst_14 = arith.constant dense<0.000000e+00> : vector<1x128xf32>
    %23 = tpu.matmul %21, %22, %cst_14 {dimension_numbers = #tpu.dot_dimension_numbers<[1], [0], [0], [1], [0, 0, 1, 1], [], []>} : vector<1x4xf32>, vector<4x128xf32>, vector<1x128xf32> -> vector<1x128xf32>
    %24 = vector.broadcast %23 : vector<1x128xf32> to vector<16x128xf32>
    %25 = arith.mulf %0, %24 : vector<16x128xf32>
    %c0_15 = arith.constant 0 : index
    %c0_16 = arith.constant 0 : index
    %26 = vector.load %arg5[%c0_15, %c0_16] : memref<128x32xf32, #tpu.memory_space<vmem>>, vector<128x32xf32>
    %cst_17 = arith.constant dense<0.000000e+00> : vector<16x32xf32>
    %27 = tpu.matmul %25, %26, %cst_17 {dimension_numbers = #tpu.dot_dimension_numbers<[1], [0], [0], [1], [0, 0, 1, 1], [], []>} : vector<16x128xf32>, vector<128x32xf32>, vector<16x32xf32> -> vector<16x32xf32>
    %c0_18 = arith.constant 0 : index
    %c0_19 = arith.constant 0 : index
    %28 = vector.load %arg6[%c0_18, %c0_19] : memref<16x32xf32, #tpu.memory_space<vmem>>, vector<16x32xf32>
    tpu.vector_store %arg6[%c0_18, %c0_19], %27 {strides = array<i32>} : memref<16x32xf32, #tpu.memory_space<vmem>>, vector<16x32xf32>,
    return
  }
}

</mosaic_0001>

<llo_original>
// kernel: tpu_custom_call.1
$region0: #{tpu_custom_call.1}
  #allocation0 [shape = 'u32[]', space=smem, size = 0x4, offset = 0x4, fixed_abs, tag = 'smem constant byte address 0x4 - core index']
  #allocation1 [shape = 'u32[144,128]{1,0:T(1,128)}', space=vmem, size = 0x12000, scoped, tag = 'internal scratch']
  %s0 = inlined_call_operand.vmem [shape: f32[16,128], index: 0, kind: input, shape index: {}]
  %s1 = inlined_call_operand.vmem [shape: f32[128,512], index: 1, kind: input, shape index: {}]
  %s2 = inlined_call_operand.vmem [shape: f32[1,512], index: 2, kind: input, shape index: {}]
  %s3 = inlined_call_operand.vmem [shape: f32[512,4], index: 3, kind: input, shape index: {}]
  %s4 = inlined_call_operand.vmem [shape: f32[4,128], index: 4, kind: input, shape index: {}]
  %s5 = inlined_call_operand.vmem [shape: f32[128,32], index: 5, kind: input, shape index: {}]
  %s6 = inlined_call_operand.hbm [shape: f32[16,32], index: 6, kind: output, shape index: {}]
  %s7 = sld [smem:[#allocation0]]
  $region34: #{tpu_custom_call.1} parent=0
    _
  %s9 = ssub.s32 1, %s7
  %s10 = scalar_select 0, %s9, %s7
  $region1: #{tpu_custom_call.1} parent=0
    #allocation2 [shape = 'u8[8192]{0}', space=vmem, size = 0x2000, scoped, tag = 'output window, operand 0, single buffered']
    #allocation3 [shape = 's32[1]{0}', space=sflag, size = 0x4, scoped, tag = 'scoped memory for tpu_custom_call.1']
    %11 = vsyncpa [#allocation3], 0
    // Predicated region
    $region2: #{tpu_custom_call.1} parent=1 // pred_check
      _
    $region3: #{tpu_custom_call.1} parent=1 // pred_check_branch
      %13 = sbr.rel (0) target = $region5
    $region4: #{tpu_custom_call.1} parent=1 // pred_region
      _
    $region5: #{tpu_custom_call.1} parent=1 // pred_fallthru
      _
    // Predicated region
    $region6: #{tpu_custom_call.1} parent=1 // pred_check
      _
    $region7: #{tpu_custom_call.1} parent=1 // pred_check_branch
      %15 = sbr.rel (0) target = $region9
    $region8: #{tpu_custom_call.1} parent=1 // pred_region
      _
    $region9: #{tpu_custom_call.1} parent=1 // pred_fallthru
      _
    // Predicated region
    $region10: #{tpu_custom_call.1} parent=1 // pred_check
      _
    $region11: #{tpu_custom_call.1} parent=1 // pred_check_branch
      %17 = sbr.rel (0) target = $region13
    $region12: #{tpu_custom_call.1} parent=1 // pred_region
      _
    $region13: #{tpu_custom_call.1} parent=1 // pred_fallthru
      _
    // Predicated region
    $region14: #{tpu_custom_call.1} parent=1 // pred_check
      _
    $region15: #{tpu_custom_call.1} parent=1 // pred_check_branch
      %19 = sbr.rel (0) target = $region17
    $region16: #{tpu_custom_call.1} parent=1 // pred_region
      _
    $region17: #{tpu_custom_call.1} parent=1 // pred_fallthru
      _
    // Predicated region
    $region18: #{tpu_custom_call.1} parent=1 // pred_check
      _
    $region19: #{tpu_custom_call.1} parent=1 // pred_check_branch
      %21 = sbr.rel (0) target = $region21
    $region20: #{tpu_custom_call.1} parent=1 // pred_region
      _
    $region21: #{tpu_custom_call.1} parent=1 // pred_fallthru
      _
    // Predicated region
    $region22: #{tpu_custom_call.1} parent=1 // pred_check
      _
    $region23: #{tpu_custom_call.1} parent=1 // pred_check_branch
      %23 = sbr.rel (0) target = $region25
    $region24: #{tpu_custom_call.1} parent=1 // pred_region
      _
    $region25: #{tpu_custom_call.1} parent=1 // pred_fallthru
      _
    %v24 = vld [vmem:[%s0] sm:$0xff]
    %v25 = vld [vmem:[%s0 + $0x8] sm:$0xff]
    %v26 = vld [vmem:[%s1] sm:$0xff]
    %v27 = vld [vmem:[%s1 + $0x8] sm:$0xff]
    %v28 = vld [vmem:[%s1 + $0x10] sm:$0xff]
    %v29 = vld [vmem:[%s1 + $0x18] sm:$0xff]
    %v30 = vld [vmem:[%s1 + $0x20] sm:$0xff]
    %v31 = vld [vmem:[%s1 + $0x28] sm:$0xff]
    %v32 = vld [vmem:[%s1 + $0x30] sm:$0xff]
    %v33 = vld [vmem:[%s1 + $0x38] sm:$0xff]
    %v34 = vld [vmem:[%s1 + $0x40] sm:$0xff]
    %v35 = vld [vmem:[%s1 + $0x48] sm:$0xff]
    %v36 = vld [vmem:[%s1 + $0x50] sm:$0xff]
    %v37 = vld [vmem:[%s1 + $0x58] sm:$0xff]
    %v38 = vld [vmem:[%s1 + $0x60] sm:$0xff]
    %v39 = vld [vmem:[%s1 + $0x68] sm:$0xff]
    %v40 = vld [vmem:[%s1 + $0x70] sm:$0xff]
    %v41 = vld [vmem:[%s1 + $0x78] sm:$0xff]
    %v42 = vld [vmem:[%s1 + $0x80] sm:$0xff]
    %v43 = vld [vmem:[%s1 + $0x88] sm:$0xff]
    %v44 = vld [vmem:[%s1 + $0x90] sm:$0xff]
    %v45 = vld [vmem:[%s1 + $0x98] sm:$0xff]
    %v46 = vld [vmem:[%s1 + $0xa0] sm:$0xff]
    %v47 = vld [vmem:[%s1 + $0xa8] sm:$0xff]
    %v48 = vld [vmem:[%s1 + $0xb0] sm:$0xff]
    %v49 = vld [vmem:[%s1 + $0xb8] sm:$0xff]
    %v50 = vld [vmem:[%s1 + $0xc0] sm:$0xff]
    %v51 = vld [vmem:[%s1 + $0xc8] sm:$0xff]
    %v52 = vld [vmem:[%s1 + $0xd0] sm:$0xff]
    %v53 = vld [vmem:[%s1 + $0xd8] sm:$0xff]
    %v54 = vld [vmem:[%s1 + $0xe0] sm:$0xff]
    %v55 = vld [vmem:[%s1 + $0xe8] sm:$0xff]
    %v56 = vld [vmem:[%s1 + $0xf0] sm:$0xff]
    %v57 = vld [vmem:[%s1 + $0xf8] sm:$0xff]
    %v58 = vld [vmem:[%s1 + $0x100] sm:$0xff]
    %v59 = vld [vmem:[%s1 + $0x108] sm:$0xff]
    %v60 = vld [vmem:[%s1 + $0x110] sm:$0xff]
    %v61 = vld [vmem:[%s1 + $0x118] sm:$0xff]
    %v62 = vld [vmem:[%s1 + $0x120] sm:$0xff]
    %v63 = vld [vmem:[%s1 + $0x128] sm:$0xff]
    %v64 = vld [vmem:[%s1 + $0x130] sm:$0xff]
    %v65 = vld [vmem:[%s1 + $0x138] sm:$0xff]
    %v66 = vld [vmem:[%s1 + $0x140] sm:$0xff]
    %v67 = vld [vmem:[%s1 + $0x148] sm:$0xff]
    %v68 = vld [vmem:[%s1 + $0x150] sm:$0xff]
    %v69 = vld [vmem:[%s1 + $0x158] sm:$0xff]
    %v70 = vld [vmem:[%s1 + $0x160] sm:$0xff]
    %v71 = vld [vmem:[%s1 + $0x168] sm:$0xff]
    %v72 = vld [vmem:[%s1 + $0x170] sm:$0xff]
    %v73 = vld [vmem:[%s1 + $0x178] sm:$0xff]
    %v74 = vld [vmem:[%s1 + $0x180] sm:$0xff]
    %v75 = vld [vmem:[%s1 + $0x188] sm:$0xff]
    %v76 = vld [vmem:[%s1 + $0x190] sm:$0xff]
    %v77 = vld [vmem:[%s1 + $0x198] sm:$0xff]
    %v78 = vld [vmem:[%s1 + $0x1a0] sm:$0xff]
    %v79 = vld [vmem:[%s1 + $0x1a8] sm:$0xff]
    %v80 = vld [vmem:[%s1 + $0x1b0] sm:$0xff]
    %v81 = vld [vmem:[%s1 + $0x1b8] sm:$0xff]
    %v82 = vld [vmem:[%s1 + $0x1c0] sm:$0xff]
    %v83 = vld [vmem:[%s1 + $0x1c8] sm:$0xff]
    %v84 = vld [vmem:[%s1 + $0x1d0] sm:$0xff]
    %v85 = vld [vmem:[%s1 + $0x1d8] sm:$0xff]
    %v86 = vld [vmem:[%s1 + $0x1e0] sm:$0xff]
    %v87 = vld [vmem:[%s1 + $0x1e8] sm:$0xff]
    %v88 = vld [vmem:[%s1 + $0x1f0] sm:$0xff]
    %v89 = vld [vmem:[%s1 + $0x1f8] sm:$0xff]
    %v90 = vld [vmem:[%s2] sm:$0xf]
    %v92 = vlaneseq
    %v93 = vshrl.u32 %v92, 7
    %v94 = vsub.s32 0, %v93
    %v95 = vrot.slane %v90, %v94
    %v96 = vlaneseq
    %v97 = vshrl.u32 %v96, 7
    %v98 = vsub.s32 1, %v97
    %v99 = vrot.slane %v90, %v98
    %v100 = vlaneseq
    %v101 = vshrl.u32 %v100, 7
    %v102 = vsub.s32 2, %v101
    %v103 = vrot.slane %v90, %v102
    %v104 = vlaneseq
    %v105 = vshrl.u32 %v104, 7
    %v106 = vsub.s32 3, %v105
    %v107 = vrot.slane %v90, %v106
    %112 = vmatprep.subr.mxu0 %v27
    %113 = vmatpush1.msra.mxu0 %v26
    %114 = vmatprep.subr.mxu0 %v31
    %115 = vmatpush1.msra.mxu0 %v30
    %116 = vmatprep.subr.mxu0 %v35
    %117 = vmatpush1.msra.mxu0 %v34
    %118 = vmatprep.subr.mxu0 %v39
    %119 = vmatpush1.msra.mxu0 %v38
    %120 = vmatprep.subr.mxu0 %v43
    %121 = vmatpush1.msra.mxu0 %v42
    %122 = vmatprep.subr.mxu0 %v47
    %123 = vmatpush1.msra.mxu0 %v46
    %124 = vmatprep.subr.mxu0 %v51
    %125 = vmatpush1.msra.mxu0 %v50
    %126 = vmatprep.subr.mxu0 %v55
    %127 = vmatpush1.msra.mxu0 %v54
    %128 = vmatprep.subr.mxu0 %v59
    %129 = vmatpush1.msra.mxu0 %v58
    %130 = vmatprep.subr.mxu0 %v63
    %131 = vmatpush1.msra.mxu0 %v62
    %132 = vmatprep.subr.mxu0 %v67
    %133 = vmatpush1.msra.mxu0 %v66
    %134 = vmatprep.subr.mxu0 %v71
    %135 = vmatpush1.msra.mxu0 %v70
    %136 = vmatprep.subr.mxu0 %v75
    %137 = vmatpush1.msra.mxu0 %v74
    %138 = vmatprep.subr.mxu0 %v79
    %139 = vmatpush1.msra.mxu0 %v78
    %140 = vmatprep.subr.mxu0 %v83
    %141 = vmatpush1.msra.mxu0 %v82
    %142 = vmatprep.subr.mxu0 %v87
    %143 = vmatpush1.msra.mxu0 %v86
    %144 = vmatprep.subr.mxu0 0.0
    %145 = vmatpush1.msra.mxu0 0.0
    %146 = vmatprep.subr.mxu0 0.0
    %147 = vmatpush1.msra.mxu0 0.0
    %148 = vmatprep.subr.mxu0 0.0
    %149 = vmatpush1.msra.mxu0 0.0
    %150 = vmatprep.subr.mxu0 0.0
    %151 = vmatpush1.msra.mxu0 0.0
    %152 = vmatprep.subr.mxu0 0.0
    %153 = vmatpush1.msra.mxu0 0.0
    %154 = vmatprep.subr.mxu0 0.0
    %155 = vmatpush1.msra.mxu0 0.0
    %156 = vmatprep.subr.mxu0 0.0
    %157 = vmatpush1.msra.mxu0 0.0
    %158 = vmatprep.subr.mxu0 0.0
    %159 = vmatpush1.msra.mxu0 0.0
    %160 = vmatprep.subr.mxu0 0.0
    %161 = vmatpush1.msra.mxu0 0.0
    %162 = vmatprep.subr.mxu0 0.0
    %163 = vmatpush1.msra.mxu0 0.0
    %164 = vmatprep.subr.mxu0 0.0
    %165 = vmatpush1.msra.mxu0 0.0
    %166 = vmatprep.subr.mxu0 0.0
    %167 = vmatpush1.msra.mxu0 0.0
    %168 = vmatprep.subr.mxu0 0.0
    %169 = vmatpush1.msra.mxu0 0.0
    %170 = vmatprep.subr.mxu0 0.0
    %171 = vmatpush1.msra.mxu0 0.0
    %172 = vmatprep.subr.mxu0 0.0
    %173 = vmatpush1.msra.mxu0 0.0
    %174 = vmatprep.subr.mxu0 0.0
    %175 = vmatpush1.msra.mxu0 0.0
    %176 = vmatprep.mubr.f32.mxu0 0.0
    %177 = vmatmul.mubr.f32.gmra.mrb[0].mxu0 %v24
    %v178 = vpop.f32.mrb[0].mxu0
    %v179 = vadd.f32 %v95, %v178
    %v180 = vpop.f32.mrb[0].mxu0
    %v181 = vadd.f32 %v99, %v180
    %182 = vmatprep.mubr.f32.mxu0 0.0
    %183 = vmatmul.mubr.f32.gmra.mrb[0].mxu0 %v25
    %v184 = vpop.f32.mrb[0].mxu0
    %v185 = vadd.f32 %v95, %v184
    %v186 = vpop.f32.mrb[0].mxu0
    %v187 = vadd.f32 %v99, %v186
    %188 = vdwg.mxu0
    %189 = vmatprep.subr.mxu0 %v29
    %190 = vmatpush1.msra.mxu0 %v28
    %191 = vmatprep.subr.mxu0 %v33
    %192 = vmatpush1.msra.mxu0 %v32
    %193 = vmatprep.subr.mxu0 %v37
    %194 = vmatpush1.msra.mxu0 %v36
    %195 = vmatprep.subr.mxu0 %v41
    %196 = vmatpush1.msra.mxu0 %v40
    %197 = vmatprep.subr.mxu0 %v45
    %198 = vmatpush1.msra.mxu0 %v44
    %199 = vmatprep.subr.mxu0 %v49
    %200 = vmatpush1.msra.mxu0 %v48
    %201 = vmatprep.subr.mxu0 %v53
    %202 = vmatpush1.msra.mxu0 %v52
    %203 = vmatprep.subr.mxu0 %v57
    %204 = vmatpush1.msra.mxu0 %v56
    %205 = vmatprep.subr.mxu0 %v61
    %206 = vmatpush1.msra.mxu0 %v60
    %207 = vmatprep.subr.mxu0 %v65
    %208 = vmatpush1.msra.mxu0 %v64
    %209 = vmatprep.subr.mxu0 %v69
    %210 = vmatpush1.msra.mxu0 %v68
    %211 = vmatprep.subr.mxu0 %v73
    %212 = vmatpush1.msra.mxu0 %v72
    %213 = vmatprep.subr.mxu0 %v77
    %214 = vmatpush1.msra.mxu0 %v76
    %215 = vmatprep.subr.mxu0 %v81
    %216 = vmatpush1.msra.mxu0 %v80
    %217 = vmatprep.subr.mxu0 %v85
    %218 = vmatpush1.msra.mxu0 %v84
    %219 = vmatprep.subr.mxu0 %v89
    %220 = vmatpush1.msra.mxu0 %v88
    %221 = vmatprep.subr.mxu0 0.0
    %222 = vmatpush1.msra.mxu0 0.0
    %223 = vmatprep.subr.mxu0 0.0
    %224 = vmatpush1.msra.mxu0 0.0
    %225 = vmatprep.subr.mxu0 0.0
    %226 = vmatpush1.msra.mxu0 0.0
    %227 = vmatprep.subr.mxu0 0.0
    %228 = vmatpush1.msra.mxu0 0.0
    %229 = vmatprep.subr.mxu0 0.0
    %230 = vmatpush1.msra.mxu0 0.0
    %231 = vmatprep.subr.mxu0 0.0
    %232 = vmatpush1.msra.mxu0 0.0
    %233 = vmatprep.subr.mxu0 0.0
    %234 = vmatpush1.msra.mxu0 0.0
    %235 = vmatprep.subr.mxu0 0.0
    %236 = vmatpush1.msra.mxu0 0.0
    %237 = vmatprep.subr.mxu0 0.0
    %238 = vmatpush1.msra.mxu0 0.0
    %239 = vmatprep.subr.mxu0 0.0
    %240 = vmatpush1.msra.mxu0 0.0
    %241 = vmatprep.subr.mxu0 0.0
    %242 = vmatpush1.msra.mxu0 0.0
    %243 = vmatprep.subr.mxu0 0.0
    %244 = vmatpush1.msra.mxu0 0.0
    %245 = vmatprep.subr.mxu0 0.0
    %246 = vmatpush1.msra.mxu0 0.0
    %247 = vmatprep.subr.mxu0 0.0
    %248 = vmatpush1.msra.mxu0 0.0
    %249 = vmatprep.subr.mxu0 0.0
    %250 = vmatpush1.msra.mxu0 0.0
    %251 = vmatprep.subr.mxu0 0.0
    %252 = vmatpush1.msra.mxu0 0.0
    %253 = vmatprep.mubr.f32.mxu0 0.0
    %254 = vmatmul.mubr.f32.gmra.mrb[0].mxu0 %v24
    %v255 = vpop.f32.mrb[0].mxu0
    %v256 = vadd.f32 %v103, %v255
    %v257 = vpop.f32.mrb[0].mxu0
    %v258 = vadd.f32 %v107, %v257
    %259 = vmatprep.mubr.f32.mxu0 0.0
    %260 = vmatmul.mubr.f32.gmra.mrb[0].mxu0 %v25
    %v261 = vpop.f32.mrb[0].mxu0
    %v262 = vadd.f32 %v103, %v261
    %v263 = vpop.f32.mrb[0].mxu0
    %v264 = vadd.f32 %v107, %v263
    %265 = vdwg.mxu0
    %v266 = vtanh.pop %v179
    %v267 = vtanh.pop %v181
    %v268 = vtanh.pop %v256
    %v269 = vtanh.pop %v258
    %v270 = vtanh.pop %v185
    %v271 = vtanh.pop %v187
    %v272 = vtanh.pop %v262
    %v273 = vtanh.pop %v264
    %v274 = vadd.f32 %v266, %v270
    %v275 = vrot.slane %v274, 4
    %v276 = vadd.f32 %v274, %v275
    %v277 = vrot.slane %v276, 2
    %v278 = vadd.f32 %v276, %v277
    %v279 = vrot.slane %v278, 1
    %v280 = vadd.f32 %v278, %v279
    %v281 = vadd.f32 %v267, %v271
    %v282 = vrot.slane %v281, 4
    %v283 = vadd.f32 %v281, %v282
    %v284 = vrot.slane %v283, 2
    %v285 = vadd.f32 %v283, %v284
    %v286 = vrot.slane %v285, 1
    %v287 = vadd.f32 %v285, %v286
    %v288 = vadd.f32 %v268, %v272
    %v289 = vrot.slane %v288, 4
    %v290 = vadd.f32 %v288, %v289
    %v291 = vrot.slane %v290, 2
    %v292 = vadd.f32 %v290, %v291
    %v293 = vrot.slane %v292, 1
    %v294 = vadd.f32 %v292, %v293
    %v295 = vadd.f32 %v269, %v273
    %v296 = vrot.slane %v295, 4
    %v297 = vadd.f32 %v295, %v296
    %v298 = vrot.slane %v297, 2
    %v299 = vadd.f32 %v297, %v298
    %v300 = vrot.slane %v299, 1
    %v301 = vadd.f32 %v299, %v300
    %v302 = vld [vmem:[%s3] sm:$0xff]
    %v303 = vld [vmem:[%s3 + $0x8] sm:$0xff]
    %v304 = vld [vmem:[%s3 + $0x10] sm:$0xff]
    %v305 = vld [vmem:[%s3 + $0x18] sm:$0xff]
    %v306 = vld [vmem:[%s3 + $0x20] sm:$0xff]
    %v307 = vld [vmem:[%s3 + $0x28] sm:$0xff]
    %v308 = vld [vmem:[%s3 + $0x30] sm:$0xff]
    %v309 = vld [vmem:[%s3 + $0x38] sm:$0xff]
    %v310 = vld [vmem:[%s3 + $0x40] sm:$0xff]
    %v311 = vld [vmem:[%s3 + $0x48] sm:$0xff]
    %v312 = vld [vmem:[%s3 + $0x50] sm:$0xff]
    %v313 = vld [vmem:[%s3 + $0x58] sm:$0xff]
    %v314 = vld [vmem:[%s3 + $0x60] sm:$0xff]
    %v315 = vld [vmem:[%s3 + $0x68] sm:$0xff]
    %v316 = vld [vmem:[%s3 + $0x70] sm:$0xff]
    %v317 = vld [vmem:[%s3 + $0x78] sm:$0xff]
    %v318 = vld [vmem:[%s3 + $0x80] sm:$0xff]
    %v319 = vld [vmem:[%s3 + $0x88] sm:$0xff]
    %v320 = vld [vmem:[%s3 + $0x90] sm:$0xff]
    %v321 = vld [vmem:[%s3 + $0x98] sm:$0xff]
    %v322 = vld [vmem:[%s3 + $0xa0] sm:$0xff]
    %v323 = vld [vmem:[%s3 + $0xa8] sm:$0xff]
    %v324 = vld [vmem:[%s3 + $0xb0] sm:$0xff]
    %v325 = vld [vmem:[%s3 + $0xb8] sm:$0xff]
    %v326 = vld [vmem:[%s3 + $0xc0] sm:$0xff]
    %v327 = vld [vmem:[%s3 + $0xc8] sm:$0xff]
    %v328 = vld [vmem:[%s3 + $0xd0] sm:$0xff]
    %v329 = vld [vmem:[%s3 + $0xd8] sm:$0xff]
    %v330 = vld [vmem:[%s3 + $0xe0] sm:$0xff]
    %v331 = vld [vmem:[%s3 + $0xe8] sm:$0xff]
    %v332 = vld [vmem:[%s3 + $0xf0] sm:$0xff]
    %v333 = vld [vmem:[%s3 + $0xf8] sm:$0xff]
    %v334 = vld [vmem:[%s3 + $0x100] sm:$0xff]
    %v335 = vld [vmem:[%s3 + $0x108] sm:$0xff]
    %v336 = vld [vmem:[%s3 + $0x110] sm:$0xff]
    %v337 = vld [vmem:[%s3 + $0x118] sm:$0xff]
    %v338 = vld [vmem:[%s3 + $0x120] sm:$0xff]
    %v339 = vld [vmem:[%s3 + $0x128] sm:$0xff]
    %v340 = vld [vmem:[%s3 + $0x130] sm:$0xff]
    %v341 = vld [vmem:[%s3 + $0x138] sm:$0xff]
    %v342 = vld [vmem:[%s3 + $0x140] sm:$0xff]
    %v343 = vld [vmem:[%s3 + $0x148] sm:$0xff]
    %v344 = vld [vmem:[%s3 + $0x150] sm:$0xff]
    %v345 = vld [vmem:[%s3 + $0x158] sm:$0xff]
    %v346 = vld [vmem:[%s3 + $0x160] sm:$0xff]
    %v347 = vld [vmem:[%s3 + $0x168] sm:$0xff]
    %v348 = vld [vmem:[%s3 + $0x170] sm:$0xff]
    %v349 = vld [vmem:[%s3 + $0x178] sm:$0xff]
    %v350 = vld [vmem:[%s3 + $0x180] sm:$0xff]
    %v351 = vld [vmem:[%s3 + $0x188] sm:$0xff]
    %v352 = vld [vmem:[%s3 + $0x190] sm:$0xff]
    %v353 = vld [vmem:[%s3 + $0x198] sm:$0xff]
    %v354 = vld [vmem:[%s3 + $0x1a0] sm:$0xff]
    %v355 = vld [vmem:[%s3 + $0x1a8] sm:$0xff]
    %v356 = vld [vmem:[%s3 + $0x1b0] sm:$0xff]
    %v357 = vld [vmem:[%s3 + $0x1b8] sm:$0xff]
    %v358 = vld [vmem:[%s3 + $0x1c0] sm:$0xff]
    %v359 = vld [vmem:[%s3 + $0x1c8] sm:$0xff]
    %v360 = vld [vmem:[%s3 + $0x1d0] sm:$0xff]
    %v361 = vld [vmem:[%s3 + $0x1d8] sm:$0xff]
    %v362 = vld [vmem:[%s3 + $0x1e0] sm:$0xff]
    %v363 = vld [vmem:[%s3 + $0x1e8] sm:$0xff]
    %v364 = vld [vmem:[%s3 + $0x1f0] sm:$0xff]
    %v365 = vld [vmem:[%s3 + $0x1f8] sm:$0xff]
    %366 = vmatprep.subr.mxu0 0.0
    %367 = vmatpush1.msra.mxu0 %v302
    %368 = vmatprep.subr.mxu0 0.0
    %369 = vmatpush1.msra.mxu0 %v303
    %370 = vmatprep.subr.mxu0 0.0
    %371 = vmatpush1.msra.mxu0 %v304
    %372 = vmatprep.subr.mxu0 0.0
    %373 = vmatpush1.msra.mxu0 %v305
    %374 = vmatprep.subr.mxu0 0.0
    %375 = vmatpush1.msra.mxu0 %v306
    %376 = vmatprep.subr.mxu0 0.0
    %377 = vmatpush1.msra.mxu0 %v307
    %378 = vmatprep.subr.mxu0 0.0
    %379 = vmatpush1.msra.mxu0 %v308
    %380 = vmatprep.subr.mxu0 0.0
    %381 = vmatpush1.msra.mxu0 %v309
    %382 = vmatprep.subr.mxu0 0.0
    %383 = vmatpush1.msra.mxu0 %v310
    %384 = vmatprep.subr.mxu0 0.0
    %385 = vmatpush1.msra.mxu0 %v311
    %386 = vmatprep.subr.mxu0 0.0
    %387 = vmatpush1.msra.mxu0 %v312
    %388 = vmatprep.subr.mxu0 0.0
    %389 = vmatpush1.msra.mxu0 %v313
    %390 = vmatprep.subr.mxu0 0.0
    %391 = vmatpush1.msra.mxu0 %v314
    %392 = vmatprep.subr.mxu0 0.0
    %393 = vmatpush1.msra.mxu0 %v315
    %394 = vmatprep.subr.mxu0 0.0
    %395 = vmatpush1.msra.mxu0 %v316
    %396 = vmatprep.subr.mxu0 0.0
    %397 = vmatpush1.msra.mxu0 %v317
    %398 = vmatprep.subr.mxu0 0.0
    %399 = vmatpush1.msra.mxu0 %v318
    %400 = vmatprep.subr.mxu0 0.0
    %401 = vmatpush1.msra.mxu0 %v319
    %402 = vmatprep.subr.mxu0 0.0
    %403 = vmatpush1.msra.mxu0 %v320
    %404 = vmatprep.subr.mxu0 0.0
    %405 = vmatpush1.msra.mxu0 %v321
    %406 = vmatprep.subr.mxu0 0.0
    %407 = vmatpush1.msra.mxu0 %v322
    %408 = vmatprep.subr.mxu0 0.0
    %409 = vmatpush1.msra.mxu0 %v323
    %410 = vmatprep.subr.mxu0 0.0
    %411 = vmatpush1.msra.mxu0 %v324
    %412 = vmatprep.subr.mxu0 0.0
    %413 = vmatpush1.msra.mxu0 %v325
    %414 = vmatprep.subr.mxu0 0.0
    %415 = vmatpush1.msra.mxu0 %v326
    %416 = vmatprep.subr.mxu0 0.0
    %417 = vmatpush1.msra.mxu0 %v327
    %418 = vmatprep.subr.mxu0 0.0
    %419 = vmatpush1.msra.mxu0 %v328
    %420 = vmatprep.subr.mxu0 0.0
    %421 = vmatpush1.msra.mxu0 %v329
    %422 = vmatprep.subr.mxu0 0.0
    %423 = vmatpush1.msra.mxu0 %v330
    %424 = vmatprep.subr.mxu0 0.0
    %425 = vmatpush1.msra.mxu0 %v331
    %426 = vmatprep.subr.mxu0 0.0
    %427 = vmatpush1.msra.mxu0 %v332
    %428 = vmatprep.subr.mxu0 0.0
    %429 = vmatpush1.msra.mxu0 %v333
    %430 = vmatprep.mubr.f32.mxu0 %v287
    %431 = vmatmul.mubr.f32.gmra.mrb[0].mxu0 %v280
    %v432 = vpop.f32.mrb[0].mxu0
    %v433 = vadd.f32 0.0, %v432
    %v434 = vpop.f32.mrb[0].mxu0
    %435 = vdwg.mxu0
    %436 = vmatprep.subr.mxu0 0.0
    %437 = vmatpush1.msra.mxu0 %v334
    %438 = vmatprep.subr.mxu0 0.0
    %439 = vmatpush1.msra.mxu0 %v335
    %440 = vmatprep.subr.mxu0 0.0
    %441 = vmatpush1.msra.mxu0 %v336
    %442 = vmatprep.subr.mxu0 0.0
    %443 = vmatpush1.msra.mxu0 %v337
    %444 = vmatprep.subr.mxu0 0.0
    %445 = vmatpush1.msra.mxu0 %v338
    %446 = vmatprep.subr.mxu0 0.0
    %447 = vmatpush1.msra.mxu0 %v339
    %448 = vmatprep.subr.mxu0 0.0
    %449 = vmatpush1.msra.mxu0 %v340
    %450 = vmatprep.subr.mxu0 0.0
    %451 = vmatpush1.msra.mxu0 %v341
    %452 = vmatprep.subr.mxu0 0.0
    %453 = vmatpush1.msra.mxu0 %v342
    %454 = vmatprep.subr.mxu0 0.0
    %455 = vmatpush1.msra.mxu0 %v343
    %456 = vmatprep.subr.mxu0 0.0
    %457 = vmatpush1.msra.mxu0 %v344
    %458 = vmatprep.subr.mxu0 0.0
    %459 = vmatpush1.msra.mxu0 %v345
    %460 = vmatprep.subr.mxu0 0.0
    %461 = vmatpush1.msra.mxu0 %v346
    %462 = vmatprep.subr.mxu0 0.0
    %463 = vmatpush1.msra.mxu0 %v347
    %464 = vmatprep.subr.mxu0 0.0
    %465 = vmatpush1.msra.mxu0 %v348
    %466 = vmatprep.subr.mxu0 0.0
    %467 = vmatpush1.msra.mxu0 %v349
    %468 = vmatprep.subr.mxu0 0.0
    %469 = vmatpush1.msra.mxu0 %v350
    %470 = vmatprep.subr.mxu0 0.0
    %471 = vmatpush1.msra.mxu0 %v351
    %472 = vmatprep.subr.mxu0 0.0
    %473 = vmatpush1.msra.mxu0 %v352
    %474 = vmatprep.subr.mxu0 0.0
    %475 = vmatpush1.msra.mxu0 %v353
    %476 = vmatprep.subr.mxu0 0.0
    %477 = vmatpush1.msra.mxu0 %v354
    %478 = vmatprep.subr.mxu0 0.0
    %479 = vmatpush1.msra.mxu0 %v355
    %480 = vmatprep.subr.mxu0 0.0
    %481 = vmatpush1.msra.mxu0 %v356
    %482 = vmatprep.subr.mxu0 0.0
    %483 = vmatpush1.msra.mxu0 %v357
    %484 = vmatprep.subr.mxu0 0.0
    %485 = vmatpush1.msra.mxu0 %v358
    %486 = vmatprep.subr.mxu0 0.0
    %487 = vmatpush1.msra.mxu0 %v359
    %488 = vmatprep.subr.mxu0 0.0
    %489 = vmatpush1.msra.mxu0 %v360
    %490 = vmatprep.subr.mxu0 0.0
    %491 = vmatpush1.msra.mxu0 %v361
    %492 = vmatprep.subr.mxu0 0.0
    %493 = vmatpush1.msra.mxu0 %v362
    %494 = vmatprep.subr.mxu0 0.0
    %495 = vmatpush1.msra.mxu0 %v363
    %496 = vmatprep.subr.mxu0 0.0
    %497 = vmatpush1.msra.mxu0 %v364
    %498 = vmatprep.subr.mxu0 0.0
    %499 = vmatpush1.msra.mxu0 %v365
    %500 = vmatprep.mubr.f32.mxu0 %v301
    %501 = vmatmul.mubr.f32.gmra.mrb[0].mxu0 %v294
    %v502 = vpop.f32.mrb[0].mxu0
    %v503 = vadd.f32 %v433, %v502
    %v504 = vpop.f32.mrb[0].mxu0
    %505 = vdwg.mxu0
    %v506 = vmul.f32 %v503, 0.0625
    %vm507 = vcmask 24576
    %v508 = vsel %vm507, %v506, -inf
    %509 = vmax.xlane.f32.xlu0 %v508
    %v510 = vpop.xlane.xlu0 %509
    %v511 = vsub.f32 %v506, %v510
    %v512 = vmul.f32 %v511, 1.442695
    %v513 = vpow.pop %v512
    %v514 = vsel %vm507, %v513, 0.0
    %515 = vadd.xlane.f32.xlu0 %v514
    %v516 = vpop.xlane.xlu0 %515
    %v517 = vrcp.pop %v516
    %v518 = vmul.f32 %v513, %v517
    %v519 = vld [vmem:[%s4] sm:$0xf]
    %vm520 = vcmask 31744
    %v522 = vsel %vm520, %v518, 0
    %vm524 = vcmask 1043456
    %v526 = vsel %vm524, %v519, 0
    %528 = vmatprep.subr.mxu0 0.0
    %529 = vmatpush1.msra.mxu0 %v526
    %530 = vmatprep.subr.mxu0 0.0
    %531 = vmatpush1.msra.mxu0 0.0
    %532 = vmatprep.subr.mxu0 0.0
    %533 = vmatpush1.msra.mxu0 0.0
    %534 = vmatprep.subr.mxu0 0.0
    %535 = vmatpush1.msra.mxu0 0.0
    %536 = vmatprep.subr.mxu0 0.0
    %537 = vmatpush1.msra.mxu0 0.0
    %538 = vmatprep.subr.mxu0 0.0
    %539 = vmatpush1.msra.mxu0 0.0
    %540 = vmatprep.subr.mxu0 0.0
    %541 = vmatpush1.msra.mxu0 0.0
    %542 = vmatprep.subr.mxu0 0.0
    %543 = vmatpush1.msra.mxu0 0.0
    %544 = vmatprep.subr.mxu0 0.0
    %545 = vmatpush1.msra.mxu0 0.0
    %546 = vmatprep.subr.mxu0 0.0
    %547 = vmatpush1.msra.mxu0 0.0
    %548 = vmatprep.subr.mxu0 0.0
    %549 = vmatpush1.msra.mxu0 0.0
    %550 = vmatprep.subr.mxu0 0.0
    %551 = vmatpush1.msra.mxu0 0.0
    %552 = vmatprep.subr.mxu0 0.0
    %553 = vmatpush1.msra.mxu0 0.0
    %554 = vmatprep.subr.mxu0 0.0
    %555 = vmatpush1.msra.mxu0 0.0
    %556 = vmatprep.subr.mxu0 0.0
    %557 = vmatpush1.msra.mxu0 0.0
    %558 = vmatprep.subr.mxu0 0.0
    %559 = vmatpush1.msra.mxu0 0.0
    %560 = vmatprep.subr.mxu0 0.0
    %561 = vmatpush1.msra.mxu0 0.0
    %562 = vmatprep.subr.mxu0 0.0
    %563 = vmatpush1.msra.mxu0 0.0
    %564 = vmatprep.subr.mxu0 0.0
    %565 = vmatpush1.msra.mxu0 0.0
    %566 = vmatprep.subr.mxu0 0.0
    %567 = vmatpush1.msra.mxu0 0.0
    %568 = vmatprep.subr.mxu0 0.0
    %569 = vmatpush1.msra.mxu0 0.0
    %570 = vmatprep.subr.mxu0 0.0
    %571 = vmatpush1.msra.mxu0 0.0
    %572 = vmatprep.subr.mxu0 0.0
    %573 = vmatpush1.msra.mxu0 0.0
    %574 = vmatprep.subr.mxu0 0.0
    %575 = vmatpush1.msra.mxu0 0.0
    %576 = vmatprep.subr.mxu0 0.0
    %577 = vmatpush1.msra.mxu0 0.0
    %578 = vmatprep.subr.mxu0 0.0
    %579 = vmatpush1.msra.mxu0 0.0
    %580 = vmatprep.subr.mxu0 0.0
    %581 = vmatpush1.msra.mxu0 0.0
    %582 = vmatprep.subr.mxu0 0.0
    %583 = vmatpush1.msra.mxu0 0.0
    %584 = vmatprep.subr.mxu0 0.0
    %585 = vmatpush1.msra.mxu0 0.0
    %586 = vmatprep.subr.mxu0 0.0
    %587 = vmatpush1.msra.mxu0 0.0
    %588 = vmatprep.subr.mxu0 0.0
    %589 = vmatpush1.msra.mxu0 0.0
    %590 = vmatprep.subr.mxu0 0.0
    %591 = vmatpush1.msra.mxu0 0.0
    %592 = vmatprep.mubr.f32.mxu0 0.0
    %593 = vmatmul.mubr.f32.gmra.mrb[0].mxu0 %v522
    %v594 = vpop.f32.mrb[0].mxu0
    %v595 = vadd.f32 0.0, %v594
    %v596 = vpop.f32.mrb[0].mxu0
    %597 = vdwg.mxu0
    %v598 = vlaneseq
    %v599 = vshrl.u32 %v598, 7
    %v600 = vsub.s32 0, %v599
    %v601 = vrot.slane %v595, %v600
    %v602 = vmul.f32 %v24, %v601
    %v603 = vmul.f32 %v25, %v601
    %v604 = vld [vmem:[%s5] sm:$0xff]
    %v605 = vld [vmem:[%s5 + $0x8] sm:$0xff]
    %v606 = vld [vmem:[%s5 + $0x10] sm:$0xff]
    %v607 = vld [vmem:[%s5 + $0x18] sm:$0xff]
    %v608 = vld [vmem:[%s5 + $0x20] sm:$0xff]
    %v609 = vld [vmem:[%s5 + $0x28] sm:$0xff]
    %v610 = vld [vmem:[%s5 + $0x30] sm:$0xff]
    %v611 = vld [vmem:[%s5 + $0x38] sm:$0xff]
    %v612 = vld [vmem:[%s5 + $0x40] sm:$0xff]
    %v613 = vld [vmem:[%s5 + $0x48] sm:$0xff]
    %v614 = vld [vmem:[%s5 + $0x50] sm:$0xff]
    %v615 = vld [vmem:[%s5 + $0x58] sm:$0xff]
    %v616 = vld [vmem:[%s5 + $0x60] sm:$0xff]
    %v617 = vld [vmem:[%s5 + $0x68] sm:$0xff]
    %v618 = vld [vmem:[%s5 + $0x70] sm:$0xff]
    %v619 = vld [vmem:[%s5 + $0x78] sm:$0xff]
    %620 = vmatprep.subr.mxu0 0.0
    %621 = vmatpush1.msra.mxu0 %v604
    %622 = vmatprep.subr.mxu0 0.0
    %623 = vmatpush1.msra.mxu0 %v605
    %624 = vmatprep.subr.mxu0 0.0
    %625 = vmatpush1.msra.mxu0 %v606
    %626 = vmatprep.subr.mxu0 0.0
    %627 = vmatpush1.msra.mxu0 %v607
    %628 = vmatprep.subr.mxu0 0.0
    %629 = vmatpush1.msra.mxu0 %v608
    %630 = vmatprep.subr.mxu0 0.0
    %631 = vmatpush1.msra.mxu0 %v609
    %632 = vmatprep.subr.mxu0 0.0
    %633 = vmatpush1.msra.mxu0 %v610
    %634 = vmatprep.subr.mxu0 0.0
    %635 = vmatpush1.msra.mxu0 %v611
    %636 = vmatprep.subr.mxu0 0.0
    %637 = vmatpush1.msra.mxu0 %v612
    %638 = vmatprep.subr.mxu0 0.0
    %639 = vmatpush1.msra.mxu0 %v613
    %640 = vmatprep.subr.mxu0 0.0
    %641 = vmatpush1.msra.mxu0 %v614
    %642 = vmatprep.subr.mxu0 0.0
    %643 = vmatpush1.msra.mxu0 %v615
    %644 = vmatprep.subr.mxu0 0.0
    %645 = vmatpush1.msra.mxu0 %v616
    %646 = vmatprep.subr.mxu0 0.0
    %647 = vmatpush1.msra.mxu0 %v617
    %648 = vmatprep.subr.mxu0 0.0
    %649 = vmatpush1.msra.mxu0 %v618
    %650 = vmatprep.subr.mxu0 0.0
    %651 = vmatpush1.msra.mxu0 %v619
    %652 = vmatprep.subr.mxu0 0.0
    %653 = vmatpush1.msra.mxu0 0.0
    %654 = vmatprep.subr.mxu0 0.0
    %655 = vmatpush1.msra.mxu0 0.0
    %656 = vmatprep.subr.mxu0 0.0
    %657 = vmatpush1.msra.mxu0 0.0
    %658 = vmatprep.subr.mxu0 0.0
    %659 = vmatpush1.msra.mxu0 0.0
    %660 = vmatprep.subr.mxu0 0.0
    %661 = vmatpush1.msra.mxu0 0.0
    %662 = vmatprep.subr.mxu0 0.0
    %663 = vmatpush1.msra.mxu0 0.0
    %664 = vmatprep.subr.mxu0 0.0
    %665 = vmatpush1.msra.mxu0 0.0
    %666 = vmatprep.subr.mxu0 0.0
    %667 = vmatpush1.msra.mxu0 0.0
    %668 = vmatprep.subr.mxu0 0.0
    %669 = vmatpush1.msra.mxu0 0.0
    %670 = vmatprep.subr.mxu0 0.0
    %671 = vmatpush1.msra.mxu0 0.0
    %672 = vmatprep.subr.mxu0 0.0
    %673 = vmatpush1.msra.mxu0 0.0
    %674 = vmatprep.subr.mxu0 0.0
    %675 = vmatpush1.msra.mxu0 0.0
    %676 = vmatprep.subr.mxu0 0.0
    %677 = vmatpush1.msra.mxu0 0.0
    %678 = vmatprep.subr.mxu0 0.0
    %679 = vmatpush1.msra.mxu0 0.0
    %680 = vmatprep.subr.mxu0 0.0
    %681 = vmatpush1.msra.mxu0 0.0
    %682 = vmatprep.subr.mxu0 0.0
    %683 = vmatpush1.msra.mxu0 0.0
    %684 = vmatprep.mubr.f32.mxu0 0.0
    %685 = vmatmul.mubr.f32.gmra.mrb[0].mxu0 %v602
    %v686 = vpop.f32.mrb[0].mxu0
    %v687 = vadd.f32 0.0, %v686
    %v688 = vpop.f32.mrb[0].mxu0
    %689 = vmatprep.mubr.f32.mxu0 0.0
    %690 = vmatmul.mubr.f32.gmra.mrb[0].mxu0 %v603
    %v691 = vpop.f32.mrb[0].mxu0
    %v692 = vadd.f32 0.0, %v691
    %v693 = vpop.f32.mrb[0].mxu0
    %694 = vdwg.mxu0
    %vm695 = vcmask 261120
    %696 = vst.msk [vmem:[#allocation2] sm:$0xff] %vm695, %v687
    %697 = vst.msk [vmem:[#allocation2 + $0x8] sm:$0xff] %vm695, %v692
    // Predicated region
    $region26: #{tpu_custom_call.1} parent=1 // pred_check
      _
    $region27: #{tpu_custom_call.1} parent=1 // pred_check_branch
      %699 = sbr.rel (0) target = $region29
    $region28: #{tpu_custom_call.1} parent=1 // pred_region
      %s701 = ssub.s32 256, 256
      %702 = vsyncadd [#allocation3], %s701
      %s703 = sshll.u32 [#allocation2], 4
      %s704 = int_to_ptr.vmem [resolvable:$true] %s703
      %709 = dma.vmem_to_hbm [thread:$0]  %s704, 256, %s6, [#allocation3], 128, 128, 8
    $region29: #{tpu_custom_call.1} parent=1 // pred_fallthru
      _
    // Predicated region
    $region30: #{tpu_custom_call.1} parent=1 // pred_check
      _
    $region31: #{tpu_custom_call.1} parent=1 // pred_check_branch
      %711 = sbr.rel (0) target = $region33
    $region32: #{tpu_custom_call.1} parent=1 // pred_region
      %712 = dma.done [#allocation3], 256
    $region33: #{tpu_custom_call.1} parent=1 // pred_fallthru
      _
    %713 = vsyncpa [#allocation3], 1

</llo_original>
